<compile_context>
chip_gen: v6e
topology: v6e:2x2x1
jax: 0.10.0
libtpu: 0.0.40
codegen_flags: <defaults>
</compile_context>

<pallas_src>
import jax
import jax.numpy as jnp
from jax.experimental import pallas as pl
from jax.experimental.pallas import tpu as pltpu

_MIN_PALLAS_ELEMS = 65536           # below this, plain XLA is faster
_MIN_BLOCK_BYTES = 1 * 1024 * 1024  # never shrink streaming blocks below ~1 MiB
_MAX_RAGGED_COLS = 16384            # cap on the folded lane dim for ragged shapes


def _cdiv(a, b):
    return -(-a // b)


def _scaled_tanh_kernel(scale_ref, x_ref, o_ref):
    x = x_ref[...]
    scale = scale_ref[0, 0].astype(x.dtype)   # f32 scalar -> input dtype, once
    o_ref[...] = jnp.tanh(x) * scale


def _device_config():
    """Per-TPU-generation streaming parameters."""
    try:
        kind = jax.devices()[0].device_kind.lower()
    except Exception:
        kind = ""
    if "v7" in kind:
        # 2 TensorCores per chip: split the grid explicitly, >= 2 blocks/core.
        sem = getattr(pltpu, "CORE_PARALLEL", "parallel")
        return dict(dimension_semantics=(sem,),
                    target_block_bytes=4 * 1024 * 1024,   # 4x blk = 16 MiB << 32 MiB scoped
                    min_steps=4)
    if "v6" in kind:
        return dict(dimension_semantics=("parallel",),
                    target_block_bytes=4 * 1024 * 1024,   # 16 MiB footprint, 32 MiB scoped
                    min_steps=2)
    # v5e / v5p / v4 / unknown: conservative (v5e scoped default is 16 MiB).
    return dict(dimension_semantics=("parallel",),
                target_block_bytes=2 * 1024 * 1024,       # 8 MiB footprint
                min_steps=2)


def _choose_view(shape, n):
    """Pick a copy-free 2-D (rows, cols) view of the flattened tensor.

    Returns None if plain XLA is the better tool (thin-column ragged shapes).
    """
    if n % 128 == 0:
        # Lane-dense fast path: widest lane width that divides n exactly.
        for lanes in (2048, 1024, 512, 256, 128):
            if n % lanes == 0:
                return n // lanes, lanes
    # Ragged: fold trailing dims into the lane axis (pure metadata reshape).
    # cols can never be a multiple of 128 here, so the lane tail is masked by
    # Pallas; no pad, no slice, no concat.
    cols = 1
    for d in reversed(shape):
        if cols * d > _MAX_RAGGED_COLS:
            break
        cols *= d
    if cols < 128:
        return None   # lane utilization would be poor; fused XLA is fine here
    return n // cols, cols


def _pick_block_rows(rows, cols, itemsize, sublane, target_bytes, min_steps):
    """Largest block (<= target_bytes) first; only split for pipeline overlap."""
    cols_vmem = _cdiv(cols, 128) * 128          # VMEM tiles pad the lane dim
    row_bytes = cols_vmem * itemsize
    tgt = (target_bytes // row_bytes) // sublane * sublane
    tgt = max(sublane, tgt)
    block_rows = min(rows, tgt)                 # == rows (full dim) is always legal
    steps = _cdiv(rows, block_rows)
    if steps < min_steps:
        # Split for DMA/compute overlap only if blocks stay >= ~1 MiB.
        cand = _cdiv(rows, min_steps)
        cand = _cdiv(cand, sublane) * sublane
        if cand < rows and cand * row_bytes >= _MIN_BLOCK_BYTES:
            block_rows = cand
    return block_rows


def scaled_tanh(x, scale_log, *, min_pallas_elems=_MIN_PALLAS_ELEMS):
    """tanh(x) * exp(scale_log), elementwise, via a Pallas TPU kernel.

    Args:
      x: array of any shape (e.g. NCHW), float dtype.
      scale_log: scalar learned parameter (PyTorch: float32, init log(3.0)).
      min_pallas_elems: below this element count, use plain XLA.
    Returns:
      array with the same shape and dtype as x.
    """
    orig_shape = x.shape
    orig_dtype = x.dtype
    n = x.size
    itemsize = jnp.dtype(orig_dtype).itemsize

    # exp in float32 (PyTorch parameter semantics), hoisted out of the kernel.
    scale_f32 = jnp.exp(jnp.asarray(scale_log, dtype=jnp.float32))

    if n == 0:
        return x

    def _xla_fallback():
        return jnp.tanh(x) * scale_f32.astype(orig_dtype)

    if n < max(min_pallas_elems, 128):
        return _xla_fallback()

    view = _choose_view(orig_shape, n)
    if view is None:
        # Thin-column ragged shape: fused XLA elementwise is already ~roofline.
        return _xla_fallback()
    rows, cols = view

    cfg = _device_config()
    sublane = max(8, 32 // itemsize)            # 8 f32 / 16 bf16 / 32 int8-fp8
    block_rows = _pick_block_rows(rows, cols, itemsize, sublane,
                                  cfg["target_block_bytes"], cfg["min_steps"])
    grid = (_cdiv(rows, block_rows),)

    x2d = x.reshape(rows, cols)                 # metadata-only reshape
    scale_smem = scale_f32.reshape(1, 1)

    cost = pl.CostEstimate(
        flops=n,
        transcendentals=n,
        bytes_accessed=2 * n * itemsize,
    )

    def _run(semantics):
        return pl.pallas_call(
            _scaled_tanh_kernel,
            out_shape=jax.ShapeDtypeStruct((rows, cols), orig_dtype),
            grid=grid,
            in_specs=[
                pl.BlockSpec(memory_space=pltpu.MemorySpace.SMEM),
                pl.BlockSpec((block_rows, cols), lambda i: (i, 0)),
            ],
            out_specs=pl.BlockSpec((block_rows, cols), lambda i: (i, 0)),
            compiler_params=pltpu.CompilerParams(dimension_semantics=semantics),
            cost_estimate=cost,
        )(scale_smem, x2d)

    try:
        out2d = _run(cfg["dimension_semantics"])
    except Exception:
        # e.g. CORE_PARALLEL rejected on this chip/toolchain: retry portably.
        if cfg["dimension_semantics"] == ("parallel",):
            raise
        out2d = _run(("parallel",))

    return out2d.reshape(orig_shape)


if __name__ == "__main__":
    # Deterministic parameter init, matching nn.Parameter(log(3.0)).
    scale_log = jnp.log(jnp.asarray(3.0, dtype=jnp.float32))
    scale_ref = jnp.exp(scale_log)

    root = jax.random.PRNGKey(0)
    k0, k1, k2, k3 = jax.random.split(root, 4)

    # 1) Small NCHW shape implied by the module; force the Pallas path.
    x_small = jax.random.normal(k0, (2, 4, 16, 16), dtype=jnp.float32)
    y_small = jax.block_until_ready(
        scaled_tanh(x_small, scale_log, min_pallas_elems=0))
    assert y_small.shape == x_small.shape and y_small.dtype == x_small.dtype
    assert jnp.allclose(y_small, jnp.tanh(x_small) * scale_ref,
                        atol=1e-6, rtol=1e-6), "small-shape mismatch"

    # 2) Larger 128-aligned shape: wide-lane, pad-free streaming path.
    x_big = jax.random.normal(k1, (4, 8, 64, 128), dtype=jnp.float32)
    y_big = jax.block_until_ready(scaled_tanh(x_big, scale_log))
    assert jnp.allclose(y_big, jnp.tanh(x_big) * scale_ref,
                        atol=1e-6, rtol=1e-6), "big-shape mismatch"

    # 3) Ragged shape (n % 128 != 0): copy-free trailing-dim slab path.
    x_rag = jax.random.normal(k2, (3, 5, 7, 11), dtype=jnp.float32)
    y_rag = jax.block_until_ready(
        scaled_tanh(x_rag, scale_log, min_pallas_elems=0))
    assert y_rag.shape == x_rag.shape
    assert jnp.allclose(y_rag, jnp.tanh(x_rag) * scale_ref,
                        atol=1e-6, rtol=1e-6), "ragged-shape mismatch"

    # 4) bf16: exercises the 16-row sublane packing and dtype-preserving path.
    x_bf = jax.random.normal(k3, (2, 8, 32, 128), dtype=jnp.bfloat16)
    y_bf = jax.block_until_ready(
        scaled_tanh(x_bf, scale_log, min_pallas_elems=0))
    ref_bf = jnp.tanh(x_bf) * scale_ref.astype(jnp.bfloat16)
    assert y_bf.shape == x_bf.shape and y_bf.dtype == jnp.bfloat16
    assert jnp.allclose(y_bf.astype(jnp.float32), ref_bf.astype(jnp.float32),
                        atol=5e-2, rtol=5e-2), "bf16 mismatch"

    print("KERNEL_OK")
</pallas_src>

<mosaic_0001>
module attributes {stable_mosaic.version = 11 : i64} {
  func.func @_scaled_tanh_kernel(%arg0: i32, %arg1: memref<1x1xf32, #tpu.memory_space<smem>>, %arg2: memref<1x2048xf32, #tpu.memory_space<vmem>>, %arg3: memref<1x2048xf32, #tpu.memory_space<vmem>>) attributes {dimension_semantics = [#tpu.dimension_semantics<parallel>], iteration_bounds = array<i64: 1>, scalar_prefetch = 0 : i64, scratch_operands = 0 : i64, tpu.core_type = #tpu.core_type<tc>, window_params = [{transform_indices = @transform_0, window_bounds = array<i64: 1, 1>}, {transform_indices = @transform_1, window_bounds = array<i64: 1, 2048>}, {transform_indices = @transform_2, window_bounds = array<i64: 1, 2048>}]} {
    %c0 = arith.constant 0 : index
    %c0_0 = arith.constant 0 : index
    %0 = vector.load %arg2[%c0, %c0_0] : memref<1x2048xf32, #tpu.memory_space<vmem>>, vector<1x2048xf32>
    %c0_1 = arith.constant 0 : index
    %c0_2 = arith.constant 0 : index
    %1 = memref.load %arg1[%c0_1, %c0_2] : memref<1x1xf32, #tpu.memory_space<smem>>
    %2 = math.tanh %0 : vector<1x2048xf32>
    %3 = vector.broadcast %1 : f32 to vector<1x2048xf32>
    %4 = arith.mulf %2, %3 : vector<1x2048xf32>
    %c0_3 = arith.constant 0 : index
    %c0_4 = arith.constant 0 : index
    %5 = vector.load %arg3[%c0_3, %c0_4] : memref<1x2048xf32, #tpu.memory_space<vmem>>, vector<1x2048xf32>
    tpu.vector_store %arg3[%c0_3, %c0_4], %4 {strides = array<i32>} : memref<1x2048xf32, #tpu.memory_space<vmem>>, vector<1x2048xf32>,
    return
  }
  func.func @transform_0(%arg0: i32) -> (i32, i32) {
    %c0_i32 = arith.constant 0 : i32
    %c0_i32_0 = arith.constant 0 : i32
    %c0_i32_1 = arith.constant 0 : i32
    return %c0_i32, %c0_i32_0 : i32, i32
  }
  func.func @transform_1(%arg0: i32) -> (i32, i32) {
    %c0_i32 = arith.constant 0 : i32
    %c0_i32_0 = arith.constant 0 : i32
    return %arg0, %c0_i32 : i32, i32
  }
  func.func @transform_2(%arg0: i32) -> (i32, i32) {
    %c0_i32 = arith.constant 0 : i32
    %c0_i32_0 = arith.constant 0 : i32
    return %arg0, %c0_i32 : i32, i32
  }
}

</mosaic_0001>

<llo_original>
// kernel: tpu_custom_call.1
$region0: #{tpu_custom_call.1}
  #allocation0 [shape = 'u32[]', space=smem, size = 0x4, offset = 0x4, fixed_abs, tag = 'smem constant byte address 0x4 - core index']
  #allocation1 [shape = 'u32[144,128]{1,0:T(1,128)}', space=vmem, size = 0x12000, scoped, tag = 'internal scratch']
  #allocation2 [shape = 'f32[1,1]{1,0:T(1,128)S(6)}', space=smem, size = 0x200, scoped, tag = 'scoped memory for tpu_custom_call.1']
  %s0 = inlined_call_operand.<no memory space> [shape: f32[1,1], index: 0, kind: input, shape index: {}]
  %s1 = inlined_call_operand.hbm [shape: f32[1,2048], index: 1, kind: input, shape index: {}]
  %s2 = inlined_call_operand.hbm [shape: f32[1,2048], index: 2, kind: output, shape index: {}]
  %s3 = sld [smem:[#allocation0]]
  $region22: #{tpu_custom_call.1} parent=0
    _
  %s5 = ssub.s32 1, %s3
  %s6 = scalar_select 0, %s5, %s3
  %7 = sst [smem:[#allocation2]] %s0
  $region1: #{tpu_custom_call.1} parent=0
    #allocation3 [shape = 'u8[8192]{0}', space=vmem, size = 0x2000, scoped, tag = 'input window, operand 1, single buffered']
    #allocation4 [shape = 's32[1]{0}', space=sflag, size = 0x4, scoped, tag = 'scoped memory for tpu_custom_call.1']
    #allocation5 [shape = 's32[1]{0}', space=sflag, size = 0x4, scoped, tag = 'scoped memory for tpu_custom_call.1']
    #allocation6 [shape = 'u8[8192]{0}', space=vmem, size = 0x2000, scoped, tag = 'output window, operand 0, single buffered']
    %8 = vsyncpa [#allocation4], 0
    %9 = vsyncpa [#allocation5], 0
    // Predicated region
    $region2: #{tpu_custom_call.1} parent=1 // pred_check
      _
    $region3: #{tpu_custom_call.1} parent=1 // pred_check_branch
      %11 = sbr.rel (0) target = $region5
    $region4: #{tpu_custom_call.1} parent=1 // pred_region
      _
    $region5: #{tpu_custom_call.1} parent=1 // pred_fallthru
      _
    // Predicated region
    $region6: #{tpu_custom_call.1} parent=1 // pred_check
      _
    $region7: #{tpu_custom_call.1} parent=1 // pred_check_branch
      %13 = sbr.rel (0) target = $region9
    $region8: #{tpu_custom_call.1} parent=1 // pred_region
      %s15 = ssub.s32 256, 256
      %16 = vsyncadd [#allocation4], %s15
      %s18 = sshll.u32 [#allocation3], 4
      %s19 = int_to_ptr.vmem [resolvable:$true] %s18
      %21 = dma.hbm_to_vmem [thread:$0]  %s1, 256, %s19, [#allocation4]
    $region9: #{tpu_custom_call.1} parent=1 // pred_fallthru
      _
    // Predicated region
    $region10: #{tpu_custom_call.1} parent=1 // pred_check
      _
    $region11: #{tpu_custom_call.1} parent=1 // pred_check_branch
      %23 = sbr.rel (0) target = $region13
    $region12: #{tpu_custom_call.1} parent=1 // pred_region
      %24 = dma.done [#allocation4], 256
    $region13: #{tpu_custom_call.1} parent=1 // pred_fallthru
      _
    %v25 = vld [vmem:[#allocation3] sm:$0xff]
    %v26 = vld [vmem:[#allocation3 + $0x8] sm:$0xff]
    %s27 = sld [smem:[#allocation2]]
    %v28 = vtanh.pop %v25
    %v29 = vtanh.pop %v26
    %v30 = vstv %s27
    %v31 = vmul.f32 %v28, %v30
    %v32 = vmul.f32 %v29, %v30
    %33 = vst [vmem:[#allocation6] sm:$0xff] %v31
    %34 = vst [vmem:[#allocation6 + $0x8] sm:$0xff] %v32
    // Predicated region
    $region14: #{tpu_custom_call.1} parent=1 // pred_check
      _
    $region15: #{tpu_custom_call.1} parent=1 // pred_check_branch
      %36 = sbr.rel (0) target = $region17
    $region16: #{tpu_custom_call.1} parent=1 // pred_region
      %s38 = ssub.s32 256, 256
      %39 = vsyncadd [#allocation5], %s38
      %s41 = sshll.u32 [#allocation6], 4
      %s42 = int_to_ptr.vmem [resolvable:$true] %s41
      %44 = dma.vmem_to_hbm [thread:$0]  %s42, 256, %s2, [#allocation5]
    $region17: #{tpu_custom_call.1} parent=1 // pred_fallthru
      _
    // Predicated region
    $region18: #{tpu_custom_call.1} parent=1 // pred_check
      _
    $region19: #{tpu_custom_call.1} parent=1 // pred_check_branch
      %46 = sbr.rel (0) target = $region21
    $region20: #{tpu_custom_call.1} parent=1 // pred_region
      %47 = dma.done [#allocation5], 256
    $region21: #{tpu_custom_call.1} parent=1 // pred_fallthru
      _
    %48 = vsyncpa [#allocation4], 1
    %49 = vsyncpa [#allocation5], 1

</llo_original>
